<compile_context>
chip_gen: v7x
topology: tpu7x:2x2x1
jax: 0.10.0
libtpu: 0.0.40
codegen_flags: <defaults>
</compile_context>

<pallas_src>
import functools

import jax
import jax.numpy as jnp
from jax import lax
from jax.experimental import pallas as pl
from jax.experimental.pallas import tpu as pltpu

IN_DIM = 12
TM_MAX = 2048          # upper bound on the row tile (lane axis of the output)
_LN2 = 0.6931471805599453


# ----------------------------- Pallas kernel ------------------------------
def _dnn_kernel(x_ref, w_ref, b_ref, out_ref, *, mode):
    x = x_ref[...]            # (TM, 12)  rows on sublanes, features on lanes
    w = w_ref[...]            # (K, 12)
    # h[k, m] = sum_f w[k, f] * x[m, f]  -> (K, TM): batch on the lane axis.
    h = lax.dot_general(
        w, x, (((1,), (1,)), ((), ())),
        precision=lax.Precision.HIGHEST,
        preferred_element_type=jnp.float32)

    if mode == "HLR":
        # out = 2 ** (-|h + b|) == exp(-|h + b| * ln2)
        out_ref[...] = jnp.exp(-jnp.abs(h + b_ref[0]) * _LN2)
    elif mode == "nom":
        out_ref[...] = h + b_ref[0]
    elif mode == "Wickelgren":
        a = h[0:1, :] + b_ref[0]
        t = h[1:2, :] + b_ref[1]
        d = h[2:3, :] + b_ref[2]
        # out = d * |t| ** (-a)
        out_ref[...] = d * jnp.exp(-a * jnp.log(jnp.abs(t)))
    elif mode == "ACT-R":
        a = h[0:1, :] + b_ref[0]
        t = h[1:2, :] + b_ref[1]
        d = h[2:3, :] + b_ref[2]
        # out = a + log(|t| ** (-d)) == a - d * log|t|
        out_ref[...] = a - d * jnp.log(jnp.abs(t))
    else:
        raise ValueError(f"unknown mode {mode}")


def _run_kernel(x, Wt, b, mode):
    """x: (N,12) f32, Wt: (K,12) f32, b: (K,) f32 -> (1, N) f32 (lane-dense)."""
    N = x.shape[0]
    K = Wt.shape[0]
    # Largest useful row tile, rounded to a lane multiple; capped at TM_MAX.
    tm = min(TM_MAX, max(128, ((N + 127) // 128) * 128))
    grid = (pl.cdiv(N, tm),)
    return pl.pallas_call(
        functools.partial(_dnn_kernel, mode=mode),
        out_shape=jax.ShapeDtypeStruct((1, N), jnp.float32),
        grid=grid,
        in_specs=[
            pl.BlockSpec((tm, IN_DIM), lambda i: (i, 0)),        # x row tile
            pl.BlockSpec((K, IN_DIM), lambda i: (0, 0)),         # weights (const)
            pl.BlockSpec(memory_space=pltpu.MemorySpace.SMEM),   # bias scalars
        ],
        out_specs=pl.BlockSpec((1, tm), lambda i: (0, i)),       # lane-dense out
        compiler_params=pltpu.CompilerParams(
            dimension_semantics=("parallel",)),
    )(x.astype(jnp.float32), Wt.astype(jnp.float32), b.astype(jnp.float32))


# --------------------- hard-coded "physics" parameters ---------------------
# (the *second* torch.tensor assignments in each branch win, as in the spec)
_HLR_PARA = jnp.array([-0.2721, -0.6535, -0.2572, 0.8952, -0.166, 0.8374,
                       -0.3589, 0.8494, -0.8019, 0.0433, -0.3157, -0.1558],
                      jnp.float32)
_W_DA = jnp.array([0.0072, 0.0069, -0.0009, -0.1503, -0.0555, 0.0029,
                   -0.3077, 0.2852, 0.6305, 0.0094, -0.024, -0.1346], jnp.float32)
_W_DT = jnp.array([0.0389, 0.062, 0.0019, -0.1978, -0.2704, 0.2406,
                   0.2656, 0.6063, -0.8075, 0.017, -0.012, 0.0323], jnp.float32)
_W_DD = jnp.array([-0.1051, -0.0507, -0.0032, 0.0804, -0.0176, -0.0432,
                   0.1237, -0.9348, 0.3024, 0.0668, -0.0215, 0.1262], jnp.float32)
_A_DA = jnp.array([0.0082, -0.0021, 0.0055, 0.0094, -0.0012, -0.0106,
                   0.2644, -0.4956, 0.0461, 0.0287, -0.0173, 0.1003], jnp.float32)
_A_DT = jnp.array([0.0068, -0.0087, 0.014, 0.0088, 0.0033, -0.0093,
                   -0.2821, -1.0167, 0.8402, -0.0259, 0.0168, -0.0986], jnp.float32)
_A_DD = jnp.array([0.008, -0.0024, 0.0043, 0.0089, -0.0017, -0.01,
                   -0.1557, 0.369, 0.3804, -0.011, -0.0128, 0.0868], jnp.float32)
_NOM_PARA = jnp.array([-0.0772, 0.0458, 0.1078, 0.0994, -0.3042, -0.4247,
                       -0.0677, 0.0449, 0.0288, 0.042, 0.0715, -0.0289], jnp.float32)


# ------------------------ parameter initialization -------------------------
def init_params(key):
    """Deterministic synthetic init mirroring DNN.__init__ shapes (12 -> 1)."""
    ks = jax.random.split(key, 7)
    xav = (6.0 / (IN_DIM + 1)) ** 0.5          # xavier_uniform_ bound for fn
    dflt = 1.0 / (IN_DIM ** 0.5)               # default nn.Linear bound
    return dict(
        w_fn=jax.random.uniform(ks[0], (IN_DIM, 1), jnp.float32, -xav, xav),
        b_fn=jnp.zeros((1,), jnp.float32),      # nn.init.constant_(bias, 0)
        w_fis=jax.random.uniform(ks[1], (IN_DIM, 1), jnp.float32, -dflt, dflt),
        b_fis=jax.random.uniform(ks[2], (1,), jnp.float32, -dflt, dflt),
        w_time=jax.random.uniform(ks[3], (IN_DIM, 1), jnp.float32, -dflt, dflt),
        b_time=jax.random.uniform(ks[4], (1,), jnp.float32, -dflt, dflt),
        w_dh=jax.random.uniform(ks[5], (IN_DIM, 1), jnp.float32, -dflt, dflt),
        b_dh=jax.random.uniform(ks[6], (1,), jnp.float32, -dflt, dflt),
    )


# ---------------------- per-branch weight / bias setup ----------------------
def _build_case(params, use_EM, pinn_flag):
    """Returns (Wt (K,12), b (K,), mode, squeeze_to_1d)."""
    if use_EM:
        if pinn_flag == "HLR":
            return params["w_fn"].T, params["b_fn"], "HLR", True       # h.squeeze()
        if pinn_flag in ("Wickelgren", "ACT-R"):
            Wt = jnp.concatenate([params["w_fis"], params["w_time"],
                                  params["w_dh"]], axis=1).T            # (3,12)
            b = jnp.concatenate([params["b_fis"], params["b_time"],
                                 params["b_dh"]])                       # (3,)
            return Wt, b, pinn_flag, False                              # (N,1) out
        if pinn_flag == "nom":
            return params["w_fn"].T, params["b_fn"], "nom", False       # (N,1) out
    else:
        if pinn_flag == "HLR":
            return _HLR_PARA[None, :], jnp.array([0.1354], jnp.float32), "HLR", True
        if pinn_flag == "Wickelgren":
            return (jnp.stack([_W_DA, _W_DT, _W_DD], axis=0),
                    jnp.array([0.2573, 0.415, 0.7294], jnp.float32), "Wickelgren", True)
        if pinn_flag == "ACT-R":
            return (jnp.stack([_A_DA, _A_DT, _A_DD], axis=0),
                    jnp.array([0.4453, -0.2955, 0.3654], jnp.float32), "ACT-R", True)
        if pinn_flag == "nom":
            return _NOM_PARA[None, :], jnp.array([0.7439], jnp.float32), "nom", True
    raise ValueError(f"bad config use_EM={use_EM}, pinn_flag={pinn_flag}")


# ------------------------------ forward pass -------------------------------
def dnn_forward(params, x, use_EM, pinn_flag):
    x = x.astype(jnp.float32)
    Wt, b, mode, squeeze = _build_case(params, use_EM, pinn_flag)
    out = _run_kernel(x, Wt, b, mode)          # (1, N), lane-dense
    return out[0] if squeeze else out.T        # (N,) or (N, 1) -- matches torch


dnn_forward = jax.jit(dnn_forward, static_argnums=(2, 3))


# ----------------------- pure-JAX reference (checking) ----------------------
def _ref_forward(params, x, use_EM, pinn_flag):
    x = x.astype(jnp.float32)
    Wt, b, mode, squeeze = _build_case(params, use_EM, pinn_flag)
    h = jnp.einsum("nf,kf->nk", x, Wt,
                   precision=lax.Precision.HIGHEST) + b[None, :]
    if mode == "HLR":
        o = jnp.exp2(-jnp.abs(h[:, 0]))
    elif mode == "nom":
        o = h[:, 0]
    elif mode == "Wickelgren":
        a, t, d = h[:, 0], h[:, 1], h[:, 2]
        o = d * jnp.abs(t) ** (-a)
    else:  # ACT-R
        a, t, d = h[:, 0], h[:, 1], h[:, 2]
        o = a - d * jnp.log(jnp.abs(t))
    return o if squeeze else o[:, None]


# ---------------------------------- main -----------------------------------
if __name__ == "__main__":
    key = jax.random.PRNGKey(0)
    pkey, xkey, xkey2 = jax.random.split(key, 3)
    params = init_params(pkey)

    configs = [(True, "HLR"), (True, "Wickelgren"), (True, "ACT-R"), (True, "nom"),
               (False, "HLR"), (False, "Wickelgren"), (False, "ACT-R"), (False, "nom")]

    ok = True

    # Small batch: exercises the single ragged (clamped) block path + value check.
    x_small = jax.random.normal(xkey, (10, IN_DIM), jnp.float32)
    for use_em, flag in configs:
        out = jax.block_until_ready(dnn_forward(params, x_small, use_em, flag))
        ref = _ref_forward(params, x_small, use_em, flag)
        ok = ok and (out.shape == ref.shape)
        ok = ok and bool(jnp.allclose(out, ref, rtol=2e-2, atol=1e-4))

    # Larger batch: exercises a multi-step grid with a ragged last block.
    x_big = jax.random.normal(xkey2, (2600, IN_DIM), jnp.float32)
    for use_em, flag in configs:
        out = jax.block_until_ready(dnn_forward(params, x_big, use_em, flag))
        ref = _ref_forward(params, x_big, use_em, flag)
        ok = ok and (out.shape == ref.shape)
        if flag in ("HLR", "nom"):   # numerically benign branches: value-check too
            ok = ok and bool(jnp.allclose(out, ref, rtol=2e-2, atol=1e-4))

    print("KERNEL_OK" if ok else "KERNEL_MISMATCH")
</pallas_src>

<mosaic_0001>
module attributes {stable_mosaic.version = 11 : i64} {
  func.func @_dnn_kernel(%arg0: i32, %arg1: memref<128x12xf32, #tpu.memory_space<vmem>>, %arg2: memref<1x12xf32, #tpu.memory_space<vmem>>, %arg3: memref<1xf32, #tpu.memory_space<smem>>, %arg4: memref<1x128xf32, #tpu.memory_space<vmem>>) attributes {dimension_semantics = [#tpu.dimension_semantics<parallel>], iteration_bounds = array<i64: 1>, scalar_prefetch = 0 : i64, scratch_operands = 0 : i64, tpu.core_type = #tpu.core_type<tc>, window_params = [{transform_indices = @transform_0, window_bounds = array<i64: 128, 12>}, {pipeline_mode = #tpu.pipeline_mode<synchronous>, transform_indices = @transform_1, window_bounds = array<i64: 1, 12>}, {transform_indices = @transform_2, window_bounds = array<i64: 1>}, {transform_indices = @transform_3, window_bounds = array<i64: 1, 128>}]} {
    %c0 = arith.constant 0 : index
    %c0_0 = arith.constant 0 : index
    %0 = vector.load %arg1[%c0, %c0_0] : memref<128x12xf32, #tpu.memory_space<vmem>>, vector<128x12xf32>
    %c0_1 = arith.constant 0 : index
    %c0_2 = arith.constant 0 : index
    %1 = vector.load %arg2[%c0_1, %c0_2] : memref<1x12xf32, #tpu.memory_space<vmem>>, vector<1x12xf32>
    %cst = arith.constant dense<0.000000e+00> : vector<1x128xf32>
    %2 = tpu.matmul %1, %0, %cst {dimension_numbers = #tpu.dot_dimension_numbers<[1], [1], [0], [0], [0, 0, 1, 0], [], []>, precision = #tpu.contract_precision<fp32>} : vector<1x12xf32>, vector<128x12xf32>, vector<1x128xf32> -> vector<1x128xf32>
    %c0_3 = arith.constant 0 : index
    %3 = memref.load %arg3[%c0_3] : memref<1xf32, #tpu.memory_space<smem>>
    %4 = vector.broadcast %3 : f32 to vector<1x128xf32>
    %5 = arith.addf %2, %4 : vector<1x128xf32>
    %6 = math.absf %5 : vector<1x128xf32>
    %cst_4 = arith.constant 0.000000e+00 : f32
    %7 = vector.broadcast %cst_4 : f32 to vector<1x128xf32>
    %8 = arith.subf %7, %6 : vector<1x128xf32>
    %cst_5 = arith.constant 0.693147182 : f32
    %9 = vector.broadcast %cst_5 : f32 to vector<1x128xf32>
    %10 = arith.mulf %8, %9 : vector<1x128xf32>
    %11 = math.exp %10 : vector<1x128xf32>
    %c0_6 = arith.constant 0 : index
    %c0_7 = arith.constant 0 : index
    %12 = vector.load %arg4[%c0_6, %c0_7] : memref<1x128xf32, #tpu.memory_space<vmem>>, vector<1x128xf32>
    tpu.vector_store %arg4[%c0_6, %c0_7], %11 {strides = array<i32>} : memref<1x128xf32, #tpu.memory_space<vmem>>, vector<1x128xf32>,
    return
  }
  func.func @transform_0(%arg0: i32) -> (i32, i32) {
    %c0_i32 = arith.constant 0 : i32
    %c0_i32_0 = arith.constant 0 : i32
    return %arg0, %c0_i32 : i32, i32
  }
  func.func @transform_1(%arg0: i32) -> (i32, i32) {
    %c0_i32 = arith.constant 0 : i32
    %c0_i32_0 = arith.constant 0 : i32
    %c0_i32_1 = arith.constant 0 : i32
    return %c0_i32, %c0_i32_0 : i32, i32
  }
  func.func @transform_2(%arg0: i32) -> i32 {
    %c0_i32 = arith.constant 0 : i32
    %c0_i32_0 = arith.constant 0 : i32
    return %c0_i32 : i32
  }
  func.func @transform_3(%arg0: i32) -> (i32, i32) {
    %c0_i32 = arith.constant 0 : i32
    %c0_i32_0 = arith.constant 0 : i32
    return %c0_i32, %arg0 : i32, i32
  }
}

</mosaic_0001>

<llo_original>
// kernel: dnn_forward.1
$region0: #{dnn_forward.1}
  #allocation0 [shape = 'u32[]', space=smem, size = 0x4, offset = 0x4, fixed_abs, tag = 'smem constant byte address 0x4 - core index']
  #allocation1 [shape = 'u32[144,128]{1,0:T(1,128)}', space=vmem, size = 0x12000, scoped, tag = 'internal scratch']
  #allocation2 [shape = 'f32[1]{0:T(128)S(6)}', space=smem, size = 0x200, scoped, tag = 'scoped memory for dnn_forward.1']
  %s0 = inlined_call_operand.hbm [shape: f32[10,12], index: 0, kind: input, shape index: {}]
  %s1 = inlined_call_operand.vmem [shape: f32[1,12], index: 1, kind: input, shape index: {}]
  %s2 = inlined_call_operand.<no memory space> [shape: f32[1], index: 2, kind: input, shape index: {}]
  %s3 = inlined_call_operand.hbm [shape: f32[1,10], index: 3, kind: output, shape index: {}]
  %s4 = sld [smem:[#allocation0]]
  $region26: #{dnn_forward.1} parent=0
    _
  %s6 = ssub.s32 1, %s4
  %s7 = scalar_select 0, %s6, %s4
  %8 = sst [smem:[#allocation2]] %s2
  $region1: #{dnn_forward.1} parent=0
    #allocation3 [shape = 'u8[65536]{0}', space=vmem, size = 0x10000, scoped, tag = 'input window, operand 0, single buffered']
    #allocation4 [shape = 's32[1]{0}', space=sflag, size = 0x4, scoped, tag = 'scoped memory for dnn_forward.1']
    #allocation5 [shape = 's32[1]{0}', space=sflag, size = 0x4, scoped, tag = 'scoped memory for dnn_forward.1']
    #allocation6 [shape = 'u8[512]{0}', space=vmem, size = 0x400, scoped, tag = 'output window, operand 0, single buffered']
    %9 = vsyncpa [#allocation4], 0
    %10 = vsyncpa [#allocation5], 0
    // Predicated region
    $region2: #{dnn_forward.1} parent=1 // pred_check
      _
    $region3: #{dnn_forward.1} parent=1 // pred_check_branch
      %12 = sbr.rel (0) target = $region5
    $region4: #{dnn_forward.1} parent=1 // pred_region
      %s14 = ssub.s32 2048, 256
      %15 = vsyncadd [#allocation4], %s14
      %s16 = sshll.u32 [#allocation3], 4
      %s17 = int_to_ptr.vmem [resolvable:$true] %s16
      %22 = dma.hbm_to_vmem [thread:$0]  %s0, 256, %s17, [#allocation4], 128, 128, 8
    $region5: #{dnn_forward.1} parent=1 // pred_fallthru
      _
    // Predicated region
    $region6: #{dnn_forward.1} parent=1 // pred_check
      _
    $region7: #{dnn_forward.1} parent=1 // pred_check_branch
      %24 = sbr.rel (0) target = $region9
    $region8: #{dnn_forward.1} parent=1 // pred_region
      _
    $region9: #{dnn_forward.1} parent=1 // pred_fallthru
      _
    // Predicated region
    $region10: #{dnn_forward.1} parent=1 // pred_check
      _
    $region11: #{dnn_forward.1} parent=1 // pred_check_branch
      %26 = sbr.rel (0) target = $region13
    $region12: #{dnn_forward.1} parent=1 // pred_region
      _
    $region13: #{dnn_forward.1} parent=1 // pred_fallthru
      _
    // Predicated region
    $region14: #{dnn_forward.1} parent=1 // pred_check
      _
    $region15: #{dnn_forward.1} parent=1 // pred_check_branch
      %28 = sbr.rel (0) target = $region17
    $region16: #{dnn_forward.1} parent=1 // pred_region
      %29 = dma.done [#allocation4], 2048
    $region17: #{dnn_forward.1} parent=1 // pred_fallthru
      _
    %v30 = vld [vmem:[#allocation3] sm:$0xff]
    %v31 = vld [vmem:[#allocation3 + $0x8] sm:$0xff]
    %v32 = vld [vmem:[#allocation3 + $0x10] sm:$0xff]
    %v33 = vld [vmem:[#allocation3 + $0x18] sm:$0xff]
    %v34 = vld [vmem:[#allocation3 + $0x20] sm:$0xff]
    %v35 = vld [vmem:[#allocation3 + $0x28] sm:$0xff]
    %v36 = vld [vmem:[#allocation3 + $0x30] sm:$0xff]
    %v37 = vld [vmem:[#allocation3 + $0x38] sm:$0xff]
    %v38 = vld [vmem:[#allocation3 + $0x40] sm:$0xff]
    %v39 = vld [vmem:[#allocation3 + $0x48] sm:$0xff]
    %v40 = vld [vmem:[#allocation3 + $0x50] sm:$0xff]
    %v41 = vld [vmem:[#allocation3 + $0x58] sm:$0xff]
    %v42 = vld [vmem:[#allocation3 + $0x60] sm:$0xff]
    %v43 = vld [vmem:[#allocation3 + $0x68] sm:$0xff]
    %v44 = vld [vmem:[#allocation3 + $0x70] sm:$0xff]
    %v45 = vld [vmem:[#allocation3 + $0x78] sm:$0xff]
    %v46 = vld [vmem:[%s1] sm:$0x1]
    %s47 = sld [smem:[#allocation2]]
    %v48 = vstv %s47
    %vm49 = vcmask 97280
    %v51 = vsel %vm49, %v46, 0
    %v54 = vsel %vm49, %v30, 0
    %v57 = vsel %vm49, %v31, 0
    %v60 = vsel %vm49, %v32, 0
    %v63 = vsel %vm49, %v33, 0
    %v66 = vsel %vm49, %v34, 0
    %v69 = vsel %vm49, %v35, 0
    %v72 = vsel %vm49, %v36, 0
    %v75 = vsel %vm49, %v37, 0
    %v78 = vsel %vm49, %v38, 0
    %v81 = vsel %vm49, %v39, 0
    %v84 = vsel %vm49, %v40, 0
    %v87 = vsel %vm49, %v41, 0
    %v90 = vsel %vm49, %v42, 0
    %v93 = vsel %vm49, %v43, 0
    %v96 = vsel %vm49, %v44, 0
    %v99 = vsel %vm49, %v45, 0
    %101 = vmatprep.subr.mxu0 0.0
    %v102 = vand.u32 %v54, 4294901760
    %103 = vmatpush1.xpose.msra.mxu0 %v102
    %104 = vmatprep.subr.mxu0 0.0
    %v105 = vand.u32 %v57, 4294901760
    %106 = vmatpush1.xpose.msra.mxu0 %v105
    %107 = vmatprep.subr.mxu0 0.0
    %v108 = vand.u32 %v60, 4294901760
    %109 = vmatpush1.xpose.msra.mxu0 %v108
    %110 = vmatprep.subr.mxu0 0.0
    %v111 = vand.u32 %v63, 4294901760
    %112 = vmatpush1.xpose.msra.mxu0 %v111
    %113 = vmatprep.subr.mxu0 0.0
    %v114 = vand.u32 %v66, 4294901760
    %115 = vmatpush1.xpose.msra.mxu0 %v114
    %116 = vmatprep.subr.mxu0 0.0
    %v117 = vand.u32 %v69, 4294901760
    %118 = vmatpush1.xpose.msra.mxu0 %v117
    %119 = vmatprep.subr.mxu0 0.0
    %v120 = vand.u32 %v72, 4294901760
    %121 = vmatpush1.xpose.msra.mxu0 %v120
    %122 = vmatprep.subr.mxu0 0.0
    %v123 = vand.u32 %v75, 4294901760
    %124 = vmatpush1.xpose.msra.mxu0 %v123
    %125 = vmatprep.subr.mxu0 0.0
    %v126 = vand.u32 %v78, 4294901760
    %127 = vmatpush1.xpose.msra.mxu0 %v126
    %128 = vmatprep.subr.mxu0 0.0
    %v129 = vand.u32 %v81, 4294901760
    %130 = vmatpush1.xpose.msra.mxu0 %v129
    %131 = vmatprep.subr.mxu0 0.0
    %v132 = vand.u32 %v84, 4294901760
    %133 = vmatpush1.xpose.msra.mxu0 %v132
    %134 = vmatprep.subr.mxu0 0.0
    %v135 = vand.u32 %v87, 4294901760
    %136 = vmatpush1.xpose.msra.mxu0 %v135
    %137 = vmatprep.subr.mxu0 0.0
    %v138 = vand.u32 %v90, 4294901760
    %139 = vmatpush1.xpose.msra.mxu0 %v138
    %140 = vmatprep.subr.mxu0 0.0
    %v141 = vand.u32 %v93, 4294901760
    %142 = vmatpush1.xpose.msra.mxu0 %v141
    %143 = vmatprep.subr.mxu0 0.0
    %v144 = vand.u32 %v96, 4294901760
    %145 = vmatpush1.xpose.msra.mxu0 %v144
    %146 = vmatprep.subr.mxu0 0.0
    %v147 = vand.u32 %v99, 4294901760
    %148 = vmatpush1.xpose.msra.mxu0 %v147
    %149 = vmatprep.subr.mxu0 0.0
    %150 = vmatpush1.xpose.msra.mxu0 0.0
    %151 = vmatprep.subr.mxu0 0.0
    %152 = vmatpush1.xpose.msra.mxu0 0.0
    %153 = vmatprep.subr.mxu0 0.0
    %154 = vmatpush1.xpose.msra.mxu0 0.0
    %155 = vmatprep.subr.mxu0 0.0
    %156 = vmatpush1.xpose.msra.mxu0 0.0
    %157 = vmatprep.subr.mxu0 0.0
    %158 = vmatpush1.xpose.msra.mxu0 0.0
    %159 = vmatprep.subr.mxu0 0.0
    %160 = vmatpush1.xpose.msra.mxu0 0.0
    %161 = vmatprep.subr.mxu0 0.0
    %162 = vmatpush1.xpose.msra.mxu0 0.0
    %163 = vmatprep.subr.mxu0 0.0
    %164 = vmatpush1.xpose.msra.mxu0 0.0
    %165 = vmatprep.subr.mxu0 0.0
    %166 = vmatpush1.xpose.msra.mxu0 0.0
    %167 = vmatprep.subr.mxu0 0.0
    %168 = vmatpush1.xpose.msra.mxu0 0.0
    %169 = vmatprep.subr.mxu0 0.0
    %170 = vmatpush1.xpose.msra.mxu0 0.0
    %171 = vmatprep.subr.mxu0 0.0
    %172 = vmatpush1.xpose.msra.mxu0 0.0
    %173 = vmatprep.subr.mxu0 0.0
    %174 = vmatpush1.xpose.msra.mxu0 0.0
    %175 = vmatprep.subr.mxu0 0.0
    %176 = vmatpush1.xpose.msra.mxu0 0.0
    %177 = vmatprep.subr.mxu0 0.0
    %178 = vmatpush1.xpose.msra.mxu0 0.0
    %179 = vmatprep.subr.mxu0 0.0
    %180 = vmatpush1.xpose.msra.mxu0 0.0
    %181 = vmatprep.mubr.f32.mxu0 0.0
    %v182 = vand.u32 %v51, 4294901760
    %v183 = vsub.f32 %v51, %v182
    %v184 = vand.u32 %v183, 4294901760
    %v185 = vsub.f32 %v183, %v184
    %v186 = vand.u32 %v185, 4294901760
    %187 = vmatmul.mubr.f32.gmra.mrb[0].mxu0 %v186
    %v188 = vpop.f32.mrb[0].mxu0
    %v189 = vadd.f32 %v48, %v188
    %v190 = vpop.f32.mrb[0].mxu0
    %191 = vdwg.mxu0
    %192 = vmatprep.subr.mxu0 0.0
    %v193 = vand.u32 %v54, 4294901760
    %v194 = vsub.f32 %v54, %v193
    %v195 = vand.u32 %v194, 4294901760
    %v196 = vsub.f32 %v194, %v195
    %v197 = vand.u32 %v196, 4294901760
    %198 = vmatpush1.xpose.msra.mxu0 %v197
    %199 = vmatprep.subr.mxu0 0.0
    %v200 = vand.u32 %v57, 4294901760
    %v201 = vsub.f32 %v57, %v200
    %v202 = vand.u32 %v201, 4294901760
    %v203 = vsub.f32 %v201, %v202
    %v204 = vand.u32 %v203, 4294901760
    %205 = vmatpush1.xpose.msra.mxu0 %v204
    %206 = vmatprep.subr.mxu0 0.0
    %v207 = vand.u32 %v60, 4294901760
    %v208 = vsub.f32 %v60, %v207
    %v209 = vand.u32 %v208, 4294901760
    %v210 = vsub.f32 %v208, %v209
    %v211 = vand.u32 %v210, 4294901760
    %212 = vmatpush1.xpose.msra.mxu0 %v211
    %213 = vmatprep.subr.mxu0 0.0
    %v214 = vand.u32 %v63, 4294901760
    %v215 = vsub.f32 %v63, %v214
    %v216 = vand.u32 %v215, 4294901760
    %v217 = vsub.f32 %v215, %v216
    %v218 = vand.u32 %v217, 4294901760
    %219 = vmatpush1.xpose.msra.mxu0 %v218
    %220 = vmatprep.subr.mxu0 0.0
    %v221 = vand.u32 %v66, 4294901760
    %v222 = vsub.f32 %v66, %v221
    %v223 = vand.u32 %v222, 4294901760
    %v224 = vsub.f32 %v222, %v223
    %v225 = vand.u32 %v224, 4294901760
    %226 = vmatpush1.xpose.msra.mxu0 %v225
    %227 = vmatprep.subr.mxu0 0.0
    %v228 = vand.u32 %v69, 4294901760
    %v229 = vsub.f32 %v69, %v228
    %v230 = vand.u32 %v229, 4294901760
    %v231 = vsub.f32 %v229, %v230
    %v232 = vand.u32 %v231, 4294901760
    %233 = vmatpush1.xpose.msra.mxu0 %v232
    %234 = vmatprep.subr.mxu0 0.0
    %v235 = vand.u32 %v72, 4294901760
    %v236 = vsub.f32 %v72, %v235
    %v237 = vand.u32 %v236, 4294901760
    %v238 = vsub.f32 %v236, %v237
    %v239 = vand.u32 %v238, 4294901760
    %240 = vmatpush1.xpose.msra.mxu0 %v239
    %241 = vmatprep.subr.mxu0 0.0
    %v242 = vand.u32 %v75, 4294901760
    %v243 = vsub.f32 %v75, %v242
    %v244 = vand.u32 %v243, 4294901760
    %v245 = vsub.f32 %v243, %v244
    %v246 = vand.u32 %v245, 4294901760
    %247 = vmatpush1.xpose.msra.mxu0 %v246
    %248 = vmatprep.subr.mxu0 0.0
    %v249 = vand.u32 %v78, 4294901760
    %v250 = vsub.f32 %v78, %v249
    %v251 = vand.u32 %v250, 4294901760
    %v252 = vsub.f32 %v250, %v251
    %v253 = vand.u32 %v252, 4294901760
    %254 = vmatpush1.xpose.msra.mxu0 %v253
    %255 = vmatprep.subr.mxu0 0.0
    %v256 = vand.u32 %v81, 4294901760
    %v257 = vsub.f32 %v81, %v256
    %v258 = vand.u32 %v257, 4294901760
    %v259 = vsub.f32 %v257, %v258
    %v260 = vand.u32 %v259, 4294901760
    %261 = vmatpush1.xpose.msra.mxu0 %v260
    %262 = vmatprep.subr.mxu0 0.0
    %v263 = vand.u32 %v84, 4294901760
    %v264 = vsub.f32 %v84, %v263
    %v265 = vand.u32 %v264, 4294901760
    %v266 = vsub.f32 %v264, %v265
    %v267 = vand.u32 %v266, 4294901760
    %268 = vmatpush1.xpose.msra.mxu0 %v267
    %269 = vmatprep.subr.mxu0 0.0
    %v270 = vand.u32 %v87, 4294901760
    %v271 = vsub.f32 %v87, %v270
    %v272 = vand.u32 %v271, 4294901760
    %v273 = vsub.f32 %v271, %v272
    %v274 = vand.u32 %v273, 4294901760
    %275 = vmatpush1.xpose.msra.mxu0 %v274
    %276 = vmatprep.subr.mxu0 0.0
    %v277 = vand.u32 %v90, 4294901760
    %v278 = vsub.f32 %v90, %v277
    %v279 = vand.u32 %v278, 4294901760
    %v280 = vsub.f32 %v278, %v279
    %v281 = vand.u32 %v280, 4294901760
    %282 = vmatpush1.xpose.msra.mxu0 %v281
    %283 = vmatprep.subr.mxu0 0.0
    %v284 = vand.u32 %v93, 4294901760
    %v285 = vsub.f32 %v93, %v284
    %v286 = vand.u32 %v285, 4294901760
    %v287 = vsub.f32 %v285, %v286
    %v288 = vand.u32 %v287, 4294901760
    %289 = vmatpush1.xpose.msra.mxu0 %v288
    %290 = vmatprep.subr.mxu0 0.0
    %v291 = vand.u32 %v96, 4294901760
    %v292 = vsub.f32 %v96, %v291
    %v293 = vand.u32 %v292, 4294901760
    %v294 = vsub.f32 %v292, %v293
    %v295 = vand.u32 %v294, 4294901760
    %296 = vmatpush1.xpose.msra.mxu0 %v295
    %297 = vmatprep.subr.mxu0 0.0
    %v298 = vand.u32 %v99, 4294901760
    %v299 = vsub.f32 %v99, %v298
    %v300 = vand.u32 %v299, 4294901760
    %v301 = vsub.f32 %v299, %v300
    %v302 = vand.u32 %v301, 4294901760
    %303 = vmatpush1.xpose.msra.mxu0 %v302
    %304 = vmatprep.subr.mxu0 0.0
    %305 = vmatpush1.xpose.msra.mxu0 0.0
    %306 = vmatprep.subr.mxu0 0.0
    %307 = vmatpush1.xpose.msra.mxu0 0.0
    %308 = vmatprep.subr.mxu0 0.0
    %309 = vmatpush1.xpose.msra.mxu0 0.0
    %310 = vmatprep.subr.mxu0 0.0
    %311 = vmatpush1.xpose.msra.mxu0 0.0
    %312 = vmatprep.subr.mxu0 0.0
    %313 = vmatpush1.xpose.msra.mxu0 0.0
    %314 = vmatprep.subr.mxu0 0.0
    %315 = vmatpush1.xpose.msra.mxu0 0.0
    %316 = vmatprep.subr.mxu0 0.0
    %317 = vmatpush1.xpose.msra.mxu0 0.0
    %318 = vmatprep.subr.mxu0 0.0
    %319 = vmatpush1.xpose.msra.mxu0 0.0
    %320 = vmatprep.subr.mxu0 0.0
    %321 = vmatpush1.xpose.msra.mxu0 0.0
    %322 = vmatprep.subr.mxu0 0.0
    %323 = vmatpush1.xpose.msra.mxu0 0.0
    %324 = vmatprep.subr.mxu0 0.0
    %325 = vmatpush1.xpose.msra.mxu0 0.0
    %326 = vmatprep.subr.mxu0 0.0
    %327 = vmatpush1.xpose.msra.mxu0 0.0
    %328 = vmatprep.subr.mxu0 0.0
    %329 = vmatpush1.xpose.msra.mxu0 0.0
    %330 = vmatprep.subr.mxu0 0.0
    %331 = vmatpush1.xpose.msra.mxu0 0.0
    %332 = vmatprep.subr.mxu0 0.0
    %333 = vmatpush1.xpose.msra.mxu0 0.0
    %334 = vmatprep.subr.mxu0 0.0
    %335 = vmatpush1.xpose.msra.mxu0 0.0
    %336 = vmatprep.mubr.f32.mxu0 0.0
    %v337 = vand.u32 %v51, 4294901760
    %338 = vmatmul.mubr.f32.gmra.mrb[0].mxu0 %v337
    %v339 = vpop.f32.mrb[0].mxu0
    %v340 = vadd.f32 %v189, %v339
    %v341 = vpop.f32.mrb[0].mxu0
    %342 = vdwg.mxu0
    %343 = vmatprep.subr.mxu0 0.0
    %v344 = vand.u32 %v54, 4294901760
    %v345 = vsub.f32 %v54, %v344
    %346 = vmatpush1.xpose.msra.mxu0 %v345
    %347 = vmatprep.subr.mxu0 0.0
    %v348 = vand.u32 %v57, 4294901760
    %v349 = vsub.f32 %v57, %v348
    %350 = vmatpush1.xpose.msra.mxu0 %v349
    %351 = vmatprep.subr.mxu0 0.0
    %v352 = vand.u32 %v60, 4294901760
    %v353 = vsub.f32 %v60, %v352
    %354 = vmatpush1.xpose.msra.mxu0 %v353
    %355 = vmatprep.subr.mxu0 0.0
    %v356 = vand.u32 %v63, 4294901760
    %v357 = vsub.f32 %v63, %v356
    %358 = vmatpush1.xpose.msra.mxu0 %v357
    %359 = vmatprep.subr.mxu0 0.0
    %v360 = vand.u32 %v66, 4294901760
    %v361 = vsub.f32 %v66, %v360
    %362 = vmatpush1.xpose.msra.mxu0 %v361
    %363 = vmatprep.subr.mxu0 0.0
    %v364 = vand.u32 %v69, 4294901760
    %v365 = vsub.f32 %v69, %v364
    %366 = vmatpush1.xpose.msra.mxu0 %v365
    %367 = vmatprep.subr.mxu0 0.0
    %v368 = vand.u32 %v72, 4294901760
    %v369 = vsub.f32 %v72, %v368
    %370 = vmatpush1.xpose.msra.mxu0 %v369
    %371 = vmatprep.subr.mxu0 0.0
    %v372 = vand.u32 %v75, 4294901760
    %v373 = vsub.f32 %v75, %v372
    %374 = vmatpush1.xpose.msra.mxu0 %v373
    %375 = vmatprep.subr.mxu0 0.0
    %v376 = vand.u32 %v78, 4294901760
    %v377 = vsub.f32 %v78, %v376
    %378 = vmatpush1.xpose.msra.mxu0 %v377
    %379 = vmatprep.subr.mxu0 0.0
    %v380 = vand.u32 %v81, 4294901760
    %v381 = vsub.f32 %v81, %v380
    %382 = vmatpush1.xpose.msra.mxu0 %v381
    %383 = vmatprep.subr.mxu0 0.0
    %v384 = vand.u32 %v84, 4294901760
    %v385 = vsub.f32 %v84, %v384
    %386 = vmatpush1.xpose.msra.mxu0 %v385
    %387 = vmatprep.subr.mxu0 0.0
    %v388 = vand.u32 %v87, 4294901760
    %v389 = vsub.f32 %v87, %v388
    %390 = vmatpush1.xpose.msra.mxu0 %v389
    %391 = vmatprep.subr.mxu0 0.0
    %v392 = vand.u32 %v90, 4294901760
    %v393 = vsub.f32 %v90, %v392
    %394 = vmatpush1.xpose.msra.mxu0 %v393
    %395 = vmatprep.subr.mxu0 0.0
    %v396 = vand.u32 %v93, 4294901760
    %v397 = vsub.f32 %v93, %v396
    %398 = vmatpush1.xpose.msra.mxu0 %v397
    %399 = vmatprep.subr.mxu0 0.0
    %v400 = vand.u32 %v96, 4294901760
    %v401 = vsub.f32 %v96, %v400
    %402 = vmatpush1.xpose.msra.mxu0 %v401
    %403 = vmatprep.subr.mxu0 0.0
    %v404 = vand.u32 %v99, 4294901760
    %v405 = vsub.f32 %v99, %v404
    %406 = vmatpush1.xpose.msra.mxu0 %v405
    %407 = vmatprep.subr.mxu0 0.0
    %408 = vmatpush1.xpose.msra.mxu0 0.0
    %409 = vmatprep.subr.mxu0 0.0
    %410 = vmatpush1.xpose.msra.mxu0 0.0
    %411 = vmatprep.subr.mxu0 0.0
    %412 = vmatpush1.xpose.msra.mxu0 0.0
    %413 = vmatprep.subr.mxu0 0.0
    %414 = vmatpush1.xpose.msra.mxu0 0.0
    %415 = vmatprep.subr.mxu0 0.0
    %416 = vmatpush1.xpose.msra.mxu0 0.0
    %417 = vmatprep.subr.mxu0 0.0
    %418 = vmatpush1.xpose.msra.mxu0 0.0
    %419 = vmatprep.subr.mxu0 0.0
    %420 = vmatpush1.xpose.msra.mxu0 0.0
    %421 = vmatprep.subr.mxu0 0.0
    %422 = vmatpush1.xpose.msra.mxu0 0.0
    %423 = vmatprep.subr.mxu0 0.0
    %424 = vmatpush1.xpose.msra.mxu0 0.0
    %425 = vmatprep.subr.mxu0 0.0
    %426 = vmatpush1.xpose.msra.mxu0 0.0
    %427 = vmatprep.subr.mxu0 0.0
    %428 = vmatpush1.xpose.msra.mxu0 0.0
    %429 = vmatprep.subr.mxu0 0.0
    %430 = vmatpush1.xpose.msra.mxu0 0.0
    %431 = vmatprep.subr.mxu0 0.0
    %432 = vmatpush1.xpose.msra.mxu0 0.0
    %433 = vmatprep.subr.mxu0 0.0
    %434 = vmatpush1.xpose.msra.mxu0 0.0
    %435 = vmatprep.subr.mxu0 0.0
    %436 = vmatpush1.xpose.msra.mxu0 0.0
    %437 = vmatprep.subr.mxu0 0.0
    %438 = vmatpush1.xpose.msra.mxu0 0.0
    %439 = vmatprep.mubr.f32.mxu0 0.0
    %v440 = vand.u32 %v51, 4294901760
    %v441 = vsub.f32 %v51, %v440
    %442 = vmatmul.mubr.f32.gmra.mrb[0].mxu0 %v441
    %v443 = vpop.f32.mrb[0].mxu0
    %v444 = vadd.f32 %v340, %v443
    %v445 = vpop.f32.mrb[0].mxu0
    %446 = vdwg.mxu0
    %447 = vmatprep.subr.mxu0 0.0
    %v448 = vand.u32 %v54, 4294901760
    %449 = vmatpush1.xpose.msra.mxu0 %v448
    %450 = vmatprep.subr.mxu0 0.0
    %v451 = vand.u32 %v57, 4294901760
    %452 = vmatpush1.xpose.msra.mxu0 %v451
    %453 = vmatprep.subr.mxu0 0.0
    %v454 = vand.u32 %v60, 4294901760
    %455 = vmatpush1.xpose.msra.mxu0 %v454
    %456 = vmatprep.subr.mxu0 0.0
    %v457 = vand.u32 %v63, 4294901760
    %458 = vmatpush1.xpose.msra.mxu0 %v457
    %459 = vmatprep.subr.mxu0 0.0
    %v460 = vand.u32 %v66, 4294901760
    %461 = vmatpush1.xpose.msra.mxu0 %v460
    %462 = vmatprep.subr.mxu0 0.0
    %v463 = vand.u32 %v69, 4294901760
    %464 = vmatpush1.xpose.msra.mxu0 %v463
    %465 = vmatprep.subr.mxu0 0.0
    %v466 = vand.u32 %v72, 4294901760
    %467 = vmatpush1.xpose.msra.mxu0 %v466
    %468 = vmatprep.subr.mxu0 0.0
    %v469 = vand.u32 %v75, 4294901760
    %470 = vmatpush1.xpose.msra.mxu0 %v469
    %471 = vmatprep.subr.mxu0 0.0
    %v472 = vand.u32 %v78, 4294901760
    %473 = vmatpush1.xpose.msra.mxu0 %v472
    %474 = vmatprep.subr.mxu0 0.0
    %v475 = vand.u32 %v81, 4294901760
    %476 = vmatpush1.xpose.msra.mxu0 %v475
    %477 = vmatprep.subr.mxu0 0.0
    %v478 = vand.u32 %v84, 4294901760
    %479 = vmatpush1.xpose.msra.mxu0 %v478
    %480 = vmatprep.subr.mxu0 0.0
    %v481 = vand.u32 %v87, 4294901760
    %482 = vmatpush1.xpose.msra.mxu0 %v481
    %483 = vmatprep.subr.mxu0 0.0
    %v484 = vand.u32 %v90, 4294901760
    %485 = vmatpush1.xpose.msra.mxu0 %v484
    %486 = vmatprep.subr.mxu0 0.0
    %v487 = vand.u32 %v93, 4294901760
    %488 = vmatpush1.xpose.msra.mxu0 %v487
    %489 = vmatprep.subr.mxu0 0.0
    %v490 = vand.u32 %v96, 4294901760
    %491 = vmatpush1.xpose.msra.mxu0 %v490
    %492 = vmatprep.subr.mxu0 0.0
    %v493 = vand.u32 %v99, 4294901760
    %494 = vmatpush1.xpose.msra.mxu0 %v493
    %495 = vmatprep.subr.mxu0 0.0
    %496 = vmatpush1.xpose.msra.mxu0 0.0
    %497 = vmatprep.subr.mxu0 0.0
    %498 = vmatpush1.xpose.msra.mxu0 0.0
    %499 = vmatprep.subr.mxu0 0.0
    %500 = vmatpush1.xpose.msra.mxu0 0.0
    %501 = vmatprep.subr.mxu0 0.0
    %502 = vmatpush1.xpose.msra.mxu0 0.0
    %503 = vmatprep.subr.mxu0 0.0
    %504 = vmatpush1.xpose.msra.mxu0 0.0
    %505 = vmatprep.subr.mxu0 0.0
    %506 = vmatpush1.xpose.msra.mxu0 0.0
    %507 = vmatprep.subr.mxu0 0.0
    %508 = vmatpush1.xpose.msra.mxu0 0.0
    %509 = vmatprep.subr.mxu0 0.0
    %510 = vmatpush1.xpose.msra.mxu0 0.0
    %511 = vmatprep.subr.mxu0 0.0
    %512 = vmatpush1.xpose.msra.mxu0 0.0
    %513 = vmatprep.subr.mxu0 0.0
    %514 = vmatpush1.xpose.msra.mxu0 0.0
    %515 = vmatprep.subr.mxu0 0.0
    %516 = vmatpush1.xpose.msra.mxu0 0.0
    %517 = vmatprep.subr.mxu0 0.0
    %518 = vmatpush1.xpose.msra.mxu0 0.0
    %519 = vmatprep.subr.mxu0 0.0
    %520 = vmatpush1.xpose.msra.mxu0 0.0
    %521 = vmatprep.subr.mxu0 0.0
    %522 = vmatpush1.xpose.msra.mxu0 0.0
    %523 = vmatprep.subr.mxu0 0.0
    %524 = vmatpush1.xpose.msra.mxu0 0.0
    %525 = vmatprep.subr.mxu0 0.0
    %526 = vmatpush1.xpose.msra.mxu0 0.0
    %527 = vmatprep.mubr.f32.mxu0 0.0
    %v528 = vand.u32 %v51, 4294901760
    %v529 = vsub.f32 %v51, %v528
    %v530 = vand.u32 %v529, 4294901760
    %531 = vmatmul.mubr.f32.gmra.mrb[0].mxu0 %v530
    %v532 = vpop.f32.mrb[0].mxu0
    %v533 = vadd.f32 %v444, %v532
    %v534 = vpop.f32.mrb[0].mxu0
    %535 = vdwg.mxu0
    %536 = vmatprep.subr.mxu0 0.0
    %v537 = vand.u32 %v54, 4294901760
    %v538 = vsub.f32 %v54, %v537
    %v539 = vand.u32 %v538, 4294901760
    %540 = vmatpush1.xpose.msra.mxu0 %v539
    %541 = vmatprep.subr.mxu0 0.0
    %v542 = vand.u32 %v57, 4294901760
    %v543 = vsub.f32 %v57, %v542
    %v544 = vand.u32 %v543, 4294901760
    %545 = vmatpush1.xpose.msra.mxu0 %v544
    %546 = vmatprep.subr.mxu0 0.0
    %v547 = vand.u32 %v60, 4294901760
    %v548 = vsub.f32 %v60, %v547
    %v549 = vand.u32 %v548, 4294901760
    %550 = vmatpush1.xpose.msra.mxu0 %v549
    %551 = vmatprep.subr.mxu0 0.0
    %v552 = vand.u32 %v63, 4294901760
    %v553 = vsub.f32 %v63, %v552
    %v554 = vand.u32 %v553, 4294901760
    %555 = vmatpush1.xpose.msra.mxu0 %v554
    %556 = vmatprep.subr.mxu0 0.0
    %v557 = vand.u32 %v66, 4294901760
    %v558 = vsub.f32 %v66, %v557
    %v559 = vand.u32 %v558, 4294901760
    %560 = vmatpush1.xpose.msra.mxu0 %v559
    %561 = vmatprep.subr.mxu0 0.0
    %v562 = vand.u32 %v69, 4294901760
    %v563 = vsub.f32 %v69, %v562
    %v564 = vand.u32 %v563, 4294901760
    %565 = vmatpush1.xpose.msra.mxu0 %v564
    %566 = vmatprep.subr.mxu0 0.0
    %v567 = vand.u32 %v72, 4294901760
    %v568 = vsub.f32 %v72, %v567
    %v569 = vand.u32 %v568, 4294901760
    %570 = vmatpush1.xpose.msra.mxu0 %v569
    %571 = vmatprep.subr.mxu0 0.0
    %v572 = vand.u32 %v75, 4294901760
    %v573 = vsub.f32 %v75, %v572
    %v574 = vand.u32 %v573, 4294901760
    %575 = vmatpush1.xpose.msra.mxu0 %v574
    %576 = vmatprep.subr.mxu0 0.0
    %v577 = vand.u32 %v78, 4294901760
    %v578 = vsub.f32 %v78, %v577
    %v579 = vand.u32 %v578, 4294901760
    %580 = vmatpush1.xpose.msra.mxu0 %v579
    %581 = vmatprep.subr.mxu0 0.0
    %v582 = vand.u32 %v81, 4294901760
    %v583 = vsub.f32 %v81, %v582
    %v584 = vand.u32 %v583, 4294901760
    %585 = vmatpush1.xpose.msra.mxu0 %v584
    %586 = vmatprep.subr.mxu0 0.0
    %v587 = vand.u32 %v84, 4294901760
    %v588 = vsub.f32 %v84, %v587
    %v589 = vand.u32 %v588, 4294901760
    %590 = vmatpush1.xpose.msra.mxu0 %v589
    %591 = vmatprep.subr.mxu0 0.0
    %v592 = vand.u32 %v87, 4294901760
    %v593 = vsub.f32 %v87, %v592
    %v594 = vand.u32 %v593, 4294901760
    %595 = vmatpush1.xpose.msra.mxu0 %v594
    %596 = vmatprep.subr.mxu0 0.0
    %v597 = vand.u32 %v90, 4294901760
    %v598 = vsub.f32 %v90, %v597
    %v599 = vand.u32 %v598, 4294901760
    %600 = vmatpush1.xpose.msra.mxu0 %v599
    %601 = vmatprep.subr.mxu0 0.0
    %v602 = vand.u32 %v93, 4294901760
    %v603 = vsub.f32 %v93, %v602
    %v604 = vand.u32 %v603, 4294901760
    %605 = vmatpush1.xpose.msra.mxu0 %v604
    %606 = vmatprep.subr.mxu0 0.0
    %v607 = vand.u32 %v96, 4294901760
    %v608 = vsub.f32 %v96, %v607
    %v609 = vand.u32 %v608, 4294901760
    %610 = vmatpush1.xpose.msra.mxu0 %v609
    %611 = vmatprep.subr.mxu0 0.0
    %v612 = vand.u32 %v99, 4294901760
    %v613 = vsub.f32 %v99, %v612
    %v614 = vand.u32 %v613, 4294901760
    %615 = vmatpush1.xpose.msra.mxu0 %v614
    %616 = vmatprep.subr.mxu0 0.0
    %617 = vmatpush1.xpose.msra.mxu0 0.0
    %618 = vmatprep.subr.mxu0 0.0
    %619 = vmatpush1.xpose.msra.mxu0 0.0
    %620 = vmatprep.subr.mxu0 0.0
    %621 = vmatpush1.xpose.msra.mxu0 0.0
    %622 = vmatprep.subr.mxu0 0.0
    %623 = vmatpush1.xpose.msra.mxu0 0.0
    %624 = vmatprep.subr.mxu0 0.0
    %625 = vmatpush1.xpose.msra.mxu0 0.0
    %626 = vmatprep.subr.mxu0 0.0
    %627 = vmatpush1.xpose.msra.mxu0 0.0
    %628 = vmatprep.subr.mxu0 0.0
    %629 = vmatpush1.xpose.msra.mxu0 0.0
    %630 = vmatprep.subr.mxu0 0.0
    %631 = vmatpush1.xpose.msra.mxu0 0.0
    %632 = vmatprep.subr.mxu0 0.0
    %633 = vmatpush1.xpose.msra.mxu0 0.0
    %634 = vmatprep.subr.mxu0 0.0
    %635 = vmatpush1.xpose.msra.mxu0 0.0
    %636 = vmatprep.subr.mxu0 0.0
    %637 = vmatpush1.xpose.msra.mxu0 0.0
    %638 = vmatprep.subr.mxu0 0.0
    %639 = vmatpush1.xpose.msra.mxu0 0.0
    %640 = vmatprep.subr.mxu0 0.0
    %641 = vmatpush1.xpose.msra.mxu0 0.0
    %642 = vmatprep.subr.mxu0 0.0
    %643 = vmatpush1.xpose.msra.mxu0 0.0
    %644 = vmatprep.subr.mxu0 0.0
    %645 = vmatpush1.xpose.msra.mxu0 0.0
    %646 = vmatprep.subr.mxu0 0.0
    %647 = vmatpush1.xpose.msra.mxu0 0.0
    %648 = vmatprep.mubr.f32.mxu0 0.0
    %v649 = vand.u32 %v51, 4294901760
    %650 = vmatmul.mubr.f32.gmra.mrb[0].mxu0 %v649
    %v651 = vpop.f32.mrb[0].mxu0
    %v652 = vadd.f32 %v533, %v651
    %v653 = vpop.f32.mrb[0].mxu0
    %654 = vdwg.mxu0
    %655 = vmatprep.subr.mxu0 0.0
    %v656 = vand.u32 %v54, 4294901760
    %657 = vmatpush1.xpose.msra.mxu0 %v656
    %658 = vmatprep.subr.mxu0 0.0
    %v659 = vand.u32 %v57, 4294901760
    %660 = vmatpush1.xpose.msra.mxu0 %v659
    %661 = vmatprep.subr.mxu0 0.0
    %v662 = vand.u32 %v60, 4294901760
    %663 = vmatpush1.xpose.msra.mxu0 %v662
    %664 = vmatprep.subr.mxu0 0.0
    %v665 = vand.u32 %v63, 4294901760
    %666 = vmatpush1.xpose.msra.mxu0 %v665
    %667 = vmatprep.subr.mxu0 0.0
    %v668 = vand.u32 %v66, 4294901760
    %669 = vmatpush1.xpose.msra.mxu0 %v668
    %670 = vmatprep.subr.mxu0 0.0
    %v671 = vand.u32 %v69, 4294901760
    %672 = vmatpush1.xpose.msra.mxu0 %v671
    %673 = vmatprep.subr.mxu0 0.0
    %v674 = vand.u32 %v72, 4294901760
    %675 = vmatpush1.xpose.msra.mxu0 %v674
    %676 = vmatprep.subr.mxu0 0.0
    %v677 = vand.u32 %v75, 4294901760
    %678 = vmatpush1.xpose.msra.mxu0 %v677
    %679 = vmatprep.subr.mxu0 0.0
    %v680 = vand.u32 %v78, 4294901760
    %681 = vmatpush1.xpose.msra.mxu0 %v680
    %682 = vmatprep.subr.mxu0 0.0
    %v683 = vand.u32 %v81, 4294901760
    %684 = vmatpush1.xpose.msra.mxu0 %v683
    %685 = vmatprep.subr.mxu0 0.0
    %v686 = vand.u32 %v84, 4294901760
    %687 = vmatpush1.xpose.msra.mxu0 %v686
    %688 = vmatprep.subr.mxu0 0.0
    %v689 = vand.u32 %v87, 4294901760
    %690 = vmatpush1.xpose.msra.mxu0 %v689
    %691 = vmatprep.subr.mxu0 0.0
    %v692 = vand.u32 %v90, 4294901760
    %693 = vmatpush1.xpose.msra.mxu0 %v692
    %694 = vmatprep.subr.mxu0 0.0
    %v695 = vand.u32 %v93, 4294901760
    %696 = vmatpush1.xpose.msra.mxu0 %v695
    %697 = vmatprep.subr.mxu0 0.0
    %v698 = vand.u32 %v96, 4294901760
    %699 = vmatpush1.xpose.msra.mxu0 %v698
    %700 = vmatprep.subr.mxu0 0.0
    %v701 = vand.u32 %v99, 4294901760
    %702 = vmatpush1.xpose.msra.mxu0 %v701
    %703 = vmatprep.subr.mxu0 0.0
    %704 = vmatpush1.xpose.msra.mxu0 0.0
    %705 = vmatprep.subr.mxu0 0.0
    %706 = vmatpush1.xpose.msra.mxu0 0.0
    %707 = vmatprep.subr.mxu0 0.0
    %708 = vmatpush1.xpose.msra.mxu0 0.0
    %709 = vmatprep.subr.mxu0 0.0
    %710 = vmatpush1.xpose.msra.mxu0 0.0
    %711 = vmatprep.subr.mxu0 0.0
    %712 = vmatpush1.xpose.msra.mxu0 0.0
    %713 = vmatprep.subr.mxu0 0.0
    %714 = vmatpush1.xpose.msra.mxu0 0.0
    %715 = vmatprep.subr.mxu0 0.0
    %716 = vmatpush1.xpose.msra.mxu0 0.0
    %717 = vmatprep.subr.mxu0 0.0
    %718 = vmatpush1.xpose.msra.mxu0 0.0
    %719 = vmatprep.subr.mxu0 0.0
    %720 = vmatpush1.xpose.msra.mxu0 0.0
    %721 = vmatprep.subr.mxu0 0.0
    %722 = vmatpush1.xpose.msra.mxu0 0.0
    %723 = vmatprep.subr.mxu0 0.0
    %724 = vmatpush1.xpose.msra.mxu0 0.0
    %725 = vmatprep.subr.mxu0 0.0
    %726 = vmatpush1.xpose.msra.mxu0 0.0
    %727 = vmatprep.subr.mxu0 0.0
    %728 = vmatpush1.xpose.msra.mxu0 0.0
    %729 = vmatprep.subr.mxu0 0.0
    %730 = vmatpush1.xpose.msra.mxu0 0.0
    %731 = vmatprep.subr.mxu0 0.0
    %732 = vmatpush1.xpose.msra.mxu0 0.0
    %733 = vmatprep.subr.mxu0 0.0
    %734 = vmatpush1.xpose.msra.mxu0 0.0
    %735 = vmatprep.mubr.f32.mxu0 0.0
    %v736 = vand.u32 %v51, 4294901760
    %737 = vmatmul.mubr.f32.gmra.mrb[0].mxu0 %v736
    %v738 = vpop.f32.mrb[0].mxu0
    %v739 = vadd.f32 %v652, %v738
    %v740 = vpop.f32.mrb[0].mxu0
    %741 = vdwg.mxu0
    %v742 = vand.u32 2147483647, %v739
    %v743 = vsub.f32 0.0, %v742
    %v744 = vmul.f32 %v743, 0.6931472
    %v745 = vmul.f32 %v744, 1.442695
    %v746 = vpow.pop %v745
    %747 = vst [vmem:[#allocation6] sm:$0x1] %v746
    // Predicated region
    $region18: #{dnn_forward.1} parent=1 // pred_check
      _
    $region19: #{dnn_forward.1} parent=1 // pred_check_branch
      %749 = sbr.rel (0) target = $region21
    $region20: #{dnn_forward.1} parent=1 // pred_region
      %s751 = ssub.s32 16, 16
      %752 = vsyncadd [#allocation5], %s751
      %s754 = sshll.u32 [#allocation6], 4
      %s755 = int_to_ptr.vmem [resolvable:$true] %s754
      %757 = dma.vmem_to_hbm [thread:$0]  %s755, 16, %s3, [#allocation5]
    $region21: #{dnn_forward.1} parent=1 // pred_fallthru
      _
    // Predicated region
    $region22: #{dnn_forward.1} parent=1 // pred_check
      _
    $region23: #{dnn_forward.1} parent=1 // pred_check_branch
      %759 = sbr.rel (0) target = $region25
    $region24: #{dnn_forward.1} parent=1 // pred_region
      %760 = dma.done [#allocation5], 16
    $region25: #{dnn_forward.1} parent=1 // pred_fallthru
      _
    %761 = vsyncpa [#allocation4], 1
    %762 = vsyncpa [#allocation5], 1

</llo_original>
